<compile_context>
chip_gen: v6e
topology: v6e:2x2x1
jax: 0.10.0
libtpu: 0.0.40
codegen_flags: <defaults>
</compile_context>

<pallas_src>
import functools

import jax
import jax.numpy as jnp
from jax.experimental import pallas as pl
from jax.experimental.pallas import tpu as pltpu


# -----------------------------------------------------------------------------
# Kernel: one grid step processes a group of batch elements packed row-wise.
# -----------------------------------------------------------------------------
def self_attention_kernel(x_ref, wqkv_ref, mask_ref, o_ref, *, head_dim):
    x = x_ref[...]                                    # bf16 (cast in wrapper)

    # Fused QKV projection: (rows, C) @ (C, 3*hd) -> single MXU push,
    # f32 accumulation.  Attention scale is already folded into Wq.
    qkv = jnp.dot(x, wqkv_ref[...], preferred_element_type=jnp.float32)
    q = qkv[:, :head_dim].astype(jnp.bfloat16)
    k = qkv[:, head_dim:2 * head_dim].astype(jnp.bfloat16)
    v = qkv[:, 2 * head_dim:].astype(jnp.bfloat16)

    # Scores for ALL packed batch elements at once: (rows, rows).
    # Contract the head dim of q against the head dim of k (trans_b-style).
    s = jax.lax.dot_general(q, k, (((1,), (1,)), ((), ())),
                            preferred_element_type=jnp.float32)

    # Precomputed additive mask: 0 where (same batch element AND causal),
    # -1e30 elsewhere (finite -> no exp(-inf - -inf) NaN risk).
    s = s + mask_ref[...]

    # Softmax over full 128-wide lane rows; reciprocal goes to the EUP.
    m = jnp.max(s, axis=-1, keepdims=True)
    e = jnp.exp(s - m)
    denom = jnp.sum(e, axis=-1, keepdims=True)
    p = e * pl.reciprocal(denom, approx=True)

    # PV: (rows, rows) @ (rows, hd).  Dropout on p is identity in eval mode.
    out = jnp.dot(p.astype(jnp.bfloat16), v,
                  preferred_element_type=jnp.float32)
    o_ref[...] = out.astype(o_ref.dtype)


# -----------------------------------------------------------------------------
# Wrapper: flatten (B, T, C) -> (B*T, C), one grid step per batch group.
# -----------------------------------------------------------------------------
def self_attention(x, wq, wk, wv):
    B, T, C = x.shape
    hd = wq.shape[-1]
    scale = float(C) ** -0.5        # PyTorch module scales by C (embed_dim)

    # Pack up to 128 rows per grid step (full sublane/MXU M utilization), but
    # prefer >= 2 grid steps so both v7x TensorCores get work.
    group_b = max(1, min(B, 128 // T))
    while B % group_b:              # fall back to a divisor of B
        group_b -= 1
    if B // group_b == 1 and B > 1:
        group_b = max(1, B // 2)
        while B % group_b:
            group_b -= 1
    num_groups = B // group_b
    rows = group_b * T

    # bf16 activations: halves the dominant HBM->VMEM DMA bytes.
    x2d = x.reshape(B * T, C).astype(jnp.bfloat16)

    # Fused (C, 3*hd) bf16 weight; attention scale folded into the Wq block.
    wqkv = jnp.concatenate(
        [wq.astype(jnp.float32) * scale,
         wk.astype(jnp.float32),
         wv.astype(jnp.float32)], axis=1).astype(jnp.bfloat16)

    # Precomputed additive mask for the packed layout (identical for every
    # group, so the constant index_map fetches it once).
    r = jnp.arange(rows, dtype=jnp.int32)
    same_batch = (r[:, None] // T) == (r[None, :] // T)
    causal = (r[None, :] % T) <= (r[:, None] % T)
    mask = jnp.where(same_batch & causal, 0.0, -1e30).astype(jnp.float32)

    kernel = functools.partial(self_attention_kernel, head_dim=hd)

    out2d = pl.pallas_call(
        kernel,
        out_shape=jax.ShapeDtypeStruct((B * T, hd), jnp.float32),
        grid=(num_groups,),
        in_specs=[
            pl.BlockSpec((rows, C), lambda g: (g, 0)),       # x (bf16)
            pl.BlockSpec((C, 3 * hd), lambda g: (0, 0)),     # fused Wqkv (bf16)
            pl.BlockSpec((rows, rows), lambda g: (0, 0)),    # additive mask
        ],
        out_specs=pl.BlockSpec((rows, hd), lambda g: (g, 0)),
        compiler_params=pltpu.CompilerParams(
            dimension_semantics=("parallel",)),              # feeds both v7x TCs
    )(x2d, wqkv, mask)

    return out2d.reshape(B, T, hd)


# -----------------------------------------------------------------------------
# Pure-JAX float32 reference (same math as the PyTorch module, eval mode).
# -----------------------------------------------------------------------------
def ref_self_attention(x, wq, wk, wv):
    B, T, C = x.shape
    wq32 = wq.astype(jnp.float32)
    wk32 = wk.astype(jnp.float32)
    wv32 = wv.astype(jnp.float32)
    q = x @ wq32
    k = x @ wk32
    v = x @ wv32
    attn = jnp.einsum("btd,bsd->bts", q, k) * (C ** -0.5)
    mask = jnp.tril(jnp.ones((T, T), bool))
    attn = jnp.where(mask[None], attn, -jnp.inf)
    attn = jax.nn.softmax(attn, axis=-1)
    return jnp.einsum("bts,bsd->btd", attn, v)


if __name__ == "__main__":
    EMBED_DIM, HEAD_DIM, BLOCK_SIZE = 128, 32, 16
    B, T = 16, 16                                   # T == block_size

    key = jax.random.PRNGKey(0)
    kx, kq, kk, kv = jax.random.split(key, 4)

    x = jax.random.normal(kx, (B, T, EMBED_DIM), jnp.float32)

    # nn.Linear(embed_dim, head_dim, bias=False)-style init, stored as
    # (in, out) = W.T, kept in bf16 (halves weight DMA bytes).
    bound = EMBED_DIM ** -0.5
    wq = jax.random.uniform(kq, (EMBED_DIM, HEAD_DIM), jnp.float32,
                            -bound, bound).astype(jnp.bfloat16)
    wk = jax.random.uniform(kk, (EMBED_DIM, HEAD_DIM), jnp.float32,
                            -bound, bound).astype(jnp.bfloat16)
    wv = jax.random.uniform(kv, (EMBED_DIM, HEAD_DIM), jnp.float32,
                            -bound, bound).astype(jnp.bfloat16)

    out = jax.block_until_ready(self_attention(x, wq, wk, wv))
    assert out.shape == (B, T, HEAD_DIM), out.shape

    ref = jax.block_until_ready(ref_self_attention(x, wq, wk, wv))
    max_err = float(jnp.max(jnp.abs(out - ref)))
    assert jnp.allclose(out, ref, atol=2e-2, rtol=2e-2), max_err

    print("KERNEL_OK")
</pallas_src>

<mosaic_0001>
module attributes {stable_mosaic.version = 11 : i64} {
  func.func @self_attention_kernel(%arg0: i32, %arg1: memref<128x128xbf16, #tpu.memory_space<vmem>>, %arg2: memref<128x96xbf16, #tpu.memory_space<vmem>>, %arg3: memref<128x128xf32, #tpu.memory_space<vmem>>, %arg4: memref<128x32xf32, #tpu.memory_space<vmem>>) attributes {dimension_semantics = [#tpu.dimension_semantics<parallel>], iteration_bounds = array<i64: 2>, scalar_prefetch = 0 : i64, scratch_operands = 0 : i64, tpu.core_type = #tpu.core_type<tc>, window_params = [{transform_indices = @transform_0, window_bounds = array<i64: 128, 128>}, {pipeline_mode = #tpu.pipeline_mode<synchronous>, transform_indices = @transform_1, window_bounds = array<i64: 128, 96>}, {pipeline_mode = #tpu.pipeline_mode<synchronous>, transform_indices = @transform_2, window_bounds = array<i64: 128, 128>}, {transform_indices = @transform_3, window_bounds = array<i64: 128, 32>}]} {
    %c0 = arith.constant 0 : index
    %c0_0 = arith.constant 0 : index
    %0 = vector.load %arg1[%c0, %c0_0] : memref<128x128xbf16, #tpu.memory_space<vmem>>, vector<128x128xbf16>
    %c0_1 = arith.constant 0 : index
    %c0_2 = arith.constant 0 : index
    %1 = vector.load %arg2[%c0_1, %c0_2] : memref<128x96xbf16, #tpu.memory_space<vmem>>, vector<128x96xbf16>
    %cst = arith.constant dense<0.000000e+00> : vector<128x96xf32>
    %2 = tpu.matmul %0, %1, %cst {dimension_numbers = #tpu.dot_dimension_numbers<[1], [0], [0], [1], [0, 0, 1, 1], [], []>} : vector<128x128xbf16>, vector<128x96xbf16>, vector<128x96xf32> -> vector<128x96xf32>
    %3 = vector.extract_strided_slice %2 {offsets = [0, 0], sizes = [128, 32], strides = [1, 1]} : vector<128x96xf32> to vector<128x32xf32>
    %4 = arith.truncf %3 : vector<128x32xf32> to vector<128x32xbf16>
    %5 = vector.extract_strided_slice %2 {offsets = [0, 32], sizes = [128, 32], strides = [1, 1]} : vector<128x96xf32> to vector<128x32xf32>
    %6 = arith.truncf %5 : vector<128x32xf32> to vector<128x32xbf16>
    %7 = vector.extract_strided_slice %2 {offsets = [0, 64], sizes = [128, 32], strides = [1, 1]} : vector<128x96xf32> to vector<128x32xf32>
    %8 = arith.truncf %7 : vector<128x32xf32> to vector<128x32xbf16>
    %cst_3 = arith.constant dense<0.000000e+00> : vector<128x128xf32>
    %9 = tpu.matmul %4, %6, %cst_3 {dimension_numbers = #tpu.dot_dimension_numbers<[1], [1], [0], [0], [0, 0, 1, 0], [], []>} : vector<128x32xbf16>, vector<128x32xbf16>, vector<128x128xf32> -> vector<128x128xf32>
    %c0_4 = arith.constant 0 : index
    %c0_5 = arith.constant 0 : index
    %10 = vector.load %arg3[%c0_4, %c0_5] : memref<128x128xf32, #tpu.memory_space<vmem>>, vector<128x128xf32>
    %11 = arith.addf %9, %10 : vector<128x128xf32>
    %cst_6 = arith.constant dense<0xFF800000> : vector<128xf32>
    %12 = vector.multi_reduction <maximumf>, %11, %cst_6 [1] : vector<128x128xf32> to vector<128xf32>
    %13 = vector.shape_cast %12 : vector<128xf32> to vector<128x1xf32>
    %14 = vector.broadcast %13 : vector<128x1xf32> to vector<128x128xf32>
    %15 = arith.subf %11, %14 : vector<128x128xf32>
    %16 = math.exp %15 : vector<128x128xf32>
    %cst_7 = arith.constant dense<0.000000e+00> : vector<128xf32>
    %17 = vector.multi_reduction <add>, %16, %cst_7 [1] : vector<128x128xf32> to vector<128xf32>
    %18 = vector.shape_cast %17 : vector<128xf32> to vector<128x1xf32>
    %19 = tpu.reciprocal %18 {approx = true} : vector<128x1xf32> -> vector<128x1xf32>
    %20 = vector.broadcast %19 : vector<128x1xf32> to vector<128x128xf32>
    %21 = arith.mulf %16, %20 : vector<128x128xf32>
    %22 = arith.truncf %21 : vector<128x128xf32> to vector<128x128xbf16>
    %cst_8 = arith.constant dense<0.000000e+00> : vector<128x32xf32>
    %23 = tpu.matmul %22, %8, %cst_8 {dimension_numbers = #tpu.dot_dimension_numbers<[1], [0], [0], [1], [0, 0, 1, 1], [], []>} : vector<128x128xbf16>, vector<128x32xbf16>, vector<128x32xf32> -> vector<128x32xf32>
    %c0_9 = arith.constant 0 : index
    %c0_10 = arith.constant 0 : index
    %24 = vector.load %arg4[%c0_9, %c0_10] : memref<128x32xf32, #tpu.memory_space<vmem>>, vector<128x32xf32>
    tpu.vector_store %arg4[%c0_9, %c0_10], %23 {strides = array<i32>} : memref<128x32xf32, #tpu.memory_space<vmem>>, vector<128x32xf32>,
    return
  }
  func.func @transform_0(%arg0: i32) -> (i32, i32) {
    %c0_i32 = arith.constant 0 : i32
    %c0_i32_0 = arith.constant 0 : i32
    return %arg0, %c0_i32 : i32, i32
  }
  func.func @transform_1(%arg0: i32) -> (i32, i32) {
    %c0_i32 = arith.constant 0 : i32
    %c0_i32_0 = arith.constant 0 : i32
    %c0_i32_1 = arith.constant 0 : i32
    return %c0_i32, %c0_i32_0 : i32, i32
  }
  func.func @transform_2(%arg0: i32) -> (i32, i32) {
    %c0_i32 = arith.constant 0 : i32
    %c0_i32_0 = arith.constant 0 : i32
    %c0_i32_1 = arith.constant 0 : i32
    return %c0_i32, %c0_i32_0 : i32, i32
  }
  func.func @transform_3(%arg0: i32) -> (i32, i32) {
    %c0_i32 = arith.constant 0 : i32
    %c0_i32_0 = arith.constant 0 : i32
    return %arg0, %c0_i32 : i32, i32
  }
}

</mosaic_0001>

<llo_original>
// kernel: tpu_custom_call.1
$region0: #{tpu_custom_call.1}
  #allocation0 [shape = 'u32[]', space=smem, size = 0x4, offset = 0x4, fixed_abs, tag = 'smem constant byte address 0x4 - core index']
  #allocation1 [shape = 'u32[144,128]{1,0:T(1,128)}', space=vmem, size = 0x12000, scoped, tag = 'internal scratch']
  %s0 = inlined_call_operand.hbm [shape: bf16[256,128], index: 0, kind: input, shape index: {}]
  %s1 = inlined_call_operand.vmem [shape: bf16[128,96], index: 1, kind: input, shape index: {}]
  %s2 = inlined_call_operand.hbm [shape: f32[128,128], index: 2, kind: input, shape index: {}]
  %s3 = inlined_call_operand.vmem [shape: f32[256,32], index: 3, kind: output, shape index: {}]
  %s4 = sld [smem:[#allocation0]]
  $region53: #{tpu_custom_call.1} parent=0
    _
  %s6 = ssub.s32 1, %s4
  %s7 = scalar_select 0, %s6, %s4
  $region1: #{tpu_custom_call.1} parent=0
    #allocation2 [shape = 'u8[65536]{0}', space=vmem, size = 0x10000, scoped, tag = 'input window, operand 0']
    #allocation3 [shape = 's32[2]{0}', space=sflag, size = 0x8, scoped, tag = 'scoped memory for tpu_custom_call.1']
    #allocation4 [shape = 'u8[65536]{0}', space=vmem, size = 0x10000, scoped, tag = 'input window, operand 2, single buffered']
    #allocation5 [shape = 's32[1]{0}', space=sflag, size = 0x4, scoped, tag = 'scoped memory for tpu_custom_call.1']
    %8 = vsyncpa [#allocation3], 0
    %s9 = scalar_lea.sflag [#allocation3], 1
    %10 = vsyncpa %s9, 0
    %11 = vsyncpa [#allocation5], 0
    loop: start=0, step=1, limit=4
    $region2: #{tpu_custom_call.1} parent=1 // loop_pre_header
      _
    $region3: #{tpu_custom_call.1} parent=1 // loop_header
      %s13 = sphi 0, %s17
      %p14 = scmp.ge.s32.totalorder %s13, 4
      %s23 = sphi 0, %s25
      %s26 = sphi 0, %s23
      %s27 = sphi 0, %s26
      %s43 = sphi 0, %s27
      %s47 = sphi 0, %s47
      %s49 = sphi 0, %s47
      %s50 = sphi 0, %s49
      %s64 = sphi 0, %s50
      %s68 = sphi 0, %s68
      %s70 = sphi 0, %s68
      %s71 = sphi 0, %s70
      %s85 = sphi 0, %s71
      %s91 = sphi 0, %s93
      %s94 = sphi 0, %s91
      %s95 = sphi 0, %s94
      %s111 = sphi 0, %s95
    $region4: #{tpu_custom_call.1} parent=1 // loop_header_branch
      %16 = sbr.rel (%p14) target = $region8
    $region5: #{tpu_custom_call.1} parent=1 // loop_body
      %s18 = ssub.s32 %s13, 1
      %s19 = ssub.s32 %s13, 2
      %s20 = sadd.s32 %s13, 1
      %s21 = ssub.s32 %s13, %s20
      %p22 = scmp.eq.s32.totalorder %s21, 0
      %s24 = sadd.s32 %s23, 1
      %s25 = scalar_select %p22, %s23, %s24
      %p28 = pneg %p22
      %p29 = scmp.eq.s32.totalorder %s13, 1
      %p30 = por %p28, %p29
      %p31 = scmp.ne.s32.totalorder %s23, %s26
      %p32 = scmp.eq.s32.totalorder %s13, 0
      %p33 = por %p31, %p32
      %p34 = scmp.ne.s32.totalorder %s23, %s26
      %p35 = scmp.eq.s32.totalorder %s18, 1
      %p36 = por %p34, %p35
      %p37 = scmp.ne.s32.totalorder %s26, %s27
      %p38 = scmp.eq.s32.totalorder %s18, 0
      %p39 = por %p37, %p38
      %p40 = scmp.ne.s32.totalorder %s26, %s27
      %p41 = scmp.eq.s32.totalorder %s19, 1
      %p42 = por %p40, %p41
      %p44 = scmp.ne.s32.totalorder %s27, %s43
      %p45 = scmp.eq.s32.totalorder %s19, 0
      %p46 = por %p44, %p45
      %s48 = sadd.s32 %s47, 1
      %p51 = scmp.eq.s32.totalorder %s13, 1
      %p52 = scmp.ne.s32.totalorder %s47, %s49
      %p53 = scmp.eq.s32.totalorder %s13, 0
      %p54 = por %p52, %p53
      %p55 = scmp.ne.s32.totalorder %s47, %s49
      %p56 = scmp.eq.s32.totalorder %s18, 1
      %p57 = por %p55, %p56
      %p58 = scmp.ne.s32.totalorder %s49, %s50
      %p59 = scmp.eq.s32.totalorder %s18, 0
      %p60 = por %p58, %p59
      %p61 = scmp.ne.s32.totalorder %s49, %s50
      %p62 = scmp.eq.s32.totalorder %s19, 1
      %p63 = por %p61, %p62
      %p65 = scmp.ne.s32.totalorder %s50, %s64
      %p66 = scmp.eq.s32.totalorder %s19, 0
      %p67 = por %p65, %p66
      %s69 = sadd.s32 %s68, 1
      %p72 = scmp.eq.s32.totalorder %s13, 1
      %p73 = scmp.ne.s32.totalorder %s68, %s70
      %p74 = scmp.eq.s32.totalorder %s13, 0
      %p75 = por %p73, %p74
      %p76 = scmp.ne.s32.totalorder %s68, %s70
      %p77 = scmp.eq.s32.totalorder %s18, 1
      %p78 = por %p76, %p77
      %p79 = scmp.ne.s32.totalorder %s70, %s71
      %p80 = scmp.eq.s32.totalorder %s18, 0
      %p81 = por %p79, %p80
      %p82 = scmp.ne.s32.totalorder %s70, %s71
      %p83 = scmp.eq.s32.totalorder %s19, 1
      %p84 = por %p82, %p83
      %p86 = scmp.ne.s32.totalorder %s71, %s85
      %p87 = scmp.eq.s32.totalorder %s19, 0
      %p88 = por %p86, %p87
      %s89 = ssub.s32 %s13, %s20
      %p90 = scmp.eq.s32.totalorder %s89, 0
      %s92 = sadd.s32 %s91, 1
      %s93 = scalar_select %p90, %s91, %s92
      %p96 = pneg %p90
      %p97 = scmp.eq.s32.totalorder %s13, 1
      %p98 = por %p96, %p97
      %p99 = scmp.ne.s32.totalorder %s91, %s94
      %p100 = scmp.eq.s32.totalorder %s13, 0
      %p101 = por %p99, %p100
      %p102 = scmp.ne.s32.totalorder %s91, %s94
      %p103 = scmp.eq.s32.totalorder %s18, 1
      %p104 = por %p102, %p103
      %p105 = scmp.ne.s32.totalorder %s94, %s95
      %p106 = scmp.eq.s32.totalorder %s18, 0
      %p107 = por %p105, %p106
      %p108 = scmp.ne.s32.totalorder %s94, %s95
      %p109 = scmp.eq.s32.totalorder %s19, 1
      %p110 = por %p108, %p109
      %p112 = scmp.ne.s32.totalorder %s95, %s111
      %p113 = scmp.eq.s32.totalorder %s19, 0
      %p114 = por %p112, %p113
      %p115 = scmp.le.s32.totalorder 1, %s13
      %p116 = scmp.lt.s32.totalorder %s13, 3
      %p117 = pnand %p115, %p116
      %p118 = pneg %p117
      // Predicated region
      $region9: #{tpu_custom_call.1} parent=5 // pred_check
        _
      $region10: #{tpu_custom_call.1} parent=5 // pred_check_branch
        %120 = sbr.rel (%p117) target = $region12
      $region11: #{tpu_custom_call.1} parent=5 // pred_region
        %s121 = ssub.s32 %s13, 1
        // Predicated region
        $region13: #{tpu_custom_call.1} parent=11 // pred_check
          %p122 = pneg %p60
        $region14: #{tpu_custom_call.1} parent=11 // pred_check_branch
          %124 = sbr.rel (%p122) target = $region16
        $region15: #{tpu_custom_call.1} parent=11 // pred_region
          _
        $region16: #{tpu_custom_call.1} parent=11 // pred_fallthru
          _
        // Predicated region
        $region17: #{tpu_custom_call.1} parent=11 // pred_check
          %p125 = pneg %p81
        $region18: #{tpu_custom_call.1} parent=11 // pred_check_branch
          %127 = sbr.rel (%p125) target = $region20
        $region19: #{tpu_custom_call.1} parent=11 // pred_region
          %s129 = ssub.s32 2048, 2048
          %130 = vsyncadd [#allocation5], %s129
          %s131 = sshll.u32 [#allocation4], 4
          %s132 = int_to_ptr.vmem [resolvable:$true] %s131
          %137 = dma.hbm_to_vmem [thread:$0]  %s2, 2048, %s132, [#allocation5], 128, 128, 8
        $region20: #{tpu_custom_call.1} parent=11 // pred_fallthru
          _
      $region12: #{tpu_custom_call.1} parent=5 // pred_fallthru
        _
      %p138 = scmp.lt.s32.totalorder %s13, 2
      // Predicated region
      $region21: #{tpu_custom_call.1} parent=5 // pred_check
        %p139 = pneg %p138
      $region22: #{tpu_custom_call.1} parent=5 // pred_check_branch
        %141 = sbr.rel (%p139) target = $region24
      $region23: #{tpu_custom_call.1} parent=5 // pred_region
        // Predicated region
        $region25: #{tpu_custom_call.1} parent=23 // pred_check
          %p142 = pneg %p33
        $region26: #{tpu_custom_call.1} parent=23 // pred_check_branch
          %144 = sbr.rel (%p142) target = $region28
        $region27: #{tpu_custom_call.1} parent=23 // pred_region
          %s145 = sand.u32 %s23, 1
          %s146 = scalar_lea.sflag [#allocation3], %s145
          %s147 = sand.u32 %s23, 1
          %s148 = smul.addr %s147, 64
          %s149 = scalar_lea.vmem [#allocation2], %s148
          %s150 = smul.u32 16, %s13
          %s152 = ssub.s32 1024, 1024
          %153 = vsyncadd %s146, %s152
          %s154 = smul.addr %s150, 64
          %s155 = scalar_lea.hbm %s0, %s154
          %s156 = sshll.u32 %s149, 4
          %s157 = int_to_ptr.vmem [resolvable:$true] %s156
          %162 = dma.hbm_to_vmem [thread:$0]  %s155, 1024, %s157, %s146, 64, 64, 4
        $region28: #{tpu_custom_call.1} parent=23 // pred_fallthru
          _
      $region24: #{tpu_custom_call.1} parent=5 // pred_fallthru
        _
      %p163 = scmp.le.s32.totalorder 1, %s13
      %p164 = scmp.lt.s32.totalorder %s13, 3
      %p165 = pnand %p163, %p164
      %p166 = pneg %p165
      // Predicated region
      $region29: #{tpu_custom_call.1} parent=5 // pred_check
        _
      $region30: #{tpu_custom_call.1} parent=5 // pred_check_branch
        %168 = sbr.rel (%p165) target = $region32
      $region31: #{tpu_custom_call.1} parent=5 // pred_region
        %s169 = ssub.s32 %s13, 1
        %s170 = sand.u32 %s26, 1
        %s171 = scalar_lea.sflag [#allocation3], %s170
        %s172 = sand.u32 %s26, 1
        %s173 = smul.addr %s172, 64
        %s174 = scalar_lea.vmem [#allocation2], %s173
        // Predicated region
        $region33: #{tpu_custom_call.1} parent=31 // pred_check
          %p175 = pneg %p39
        $region34: #{tpu_custom_call.1} parent=31 // pred_check_branch
          %177 = sbr.rel (%p175) target = $region36
        $region35: #{tpu_custom_call.1} parent=31 // pred_region
          %178 = dma.done %s171, 1024
        $region36: #{tpu_custom_call.1} parent=31 // pred_fallthru
          _
        // Predicated region
        $region37: #{tpu_custom_call.1} parent=31 // pred_check
          %p179 = pneg %p81
        $region38: #{tpu_custom_call.1} parent=31 // pred_check_branch
          %181 = sbr.rel (%p179) target = $region40
        $region39: #{tpu_custom_call.1} parent=31 // pred_region
          %182 = dma.done [#allocation5], 2048
        $region40: #{tpu_custom_call.1} parent=31 // pred_fallthru
          _
        %s183 = sand.u32 %s26, 1
        %s184 = scalar_lea.sflag [#allocation3], %s183
        %s185 = sand.u32 %s26, 1
        %s186 = smul.addr %s185, 64
        %s187 = scalar_lea.vmem [#allocation2], %s186
        %p188 = pneg %p39
        %p189 = pneg %p36
        %p190 = pneg %p60
        %p191 = pneg %p57
        %p192 = pneg %p81
        %p193 = pneg %p78
        %p194 = pneg %p107
        %p195 = pneg %p104
        %s196 = smul.u32 16, %s18
        %p197 = scmp.lt.s32.totalorder %s196, 31
        %s198 = scalar_select %p197, %s196, 31
        %s199 = smul.addr %s198, 8
        %s200 = scalar_lea.vmem %s3, %s199
        %s201 = smul.u32 16, %s18
        %s202 = smul.u32 16, %s18
        %p203 = scmp.lt.s32.totalorder %s202, 31
        %s204 = scalar_select %p203, %s202, 31
        %s205 = smul.addr %s204, 8
        %s206 = scalar_lea.vmem %s3, %s205
        %s207 = smul.u32 16, %s18
        %v209 = vld [vmem:[%s174] sm:$0xf]
        %v210 = vld [vmem:[%s174 + $0x4] sm:$0xf]
        %v211 = vld [vmem:[%s174 + $0x8] sm:$0xf]
        %v212 = vld [vmem:[%s174 + $0xc] sm:$0xf]
        %v213 = vld [vmem:[%s174 + $0x10] sm:$0xf]
        %v214 = vld [vmem:[%s174 + $0x14] sm:$0xf]
        %v215 = vld [vmem:[%s174 + $0x18] sm:$0xf]
        %v216 = vld [vmem:[%s174 + $0x1c] sm:$0xf]
        %v217 = vld [vmem:[%s174 + $0x20] sm:$0xf]
        %v218 = vld [vmem:[%s174 + $0x24] sm:$0xf]
        %v219 = vld [vmem:[%s174 + $0x28] sm:$0xf]
        %v220 = vld [vmem:[%s174 + $0x2c] sm:$0xf]
        %v221 = vld [vmem:[%s174 + $0x30] sm:$0xf]
        %v222 = vld [vmem:[%s174 + $0x34] sm:$0xf]
        %v223 = vld [vmem:[%s174 + $0x38] sm:$0xf]
        %v224 = vld [vmem:[%s174 + $0x3c] sm:$0xf]
        %v225 = vld [vmem:[%s1] sm:$0xf]
        %v226 = vld [vmem:[%s1 + $0x4] sm:$0xf]
        %v227 = vld [vmem:[%s1 + $0x8] sm:$0xf]
        %v228 = vld [vmem:[%s1 + $0xc] sm:$0xf]
        %v229 = vld [vmem:[%s1 + $0x10] sm:$0xf]
        %v230 = vld [vmem:[%s1 + $0x14] sm:$0xf]
        %v231 = vld [vmem:[%s1 + $0x18] sm:$0xf]
        %v232 = vld [vmem:[%s1 + $0x1c] sm:$0xf]
        %v233 = vld [vmem:[%s1 + $0x20] sm:$0xf]
        %v234 = vld [vmem:[%s1 + $0x24] sm:$0xf]
        %v235 = vld [vmem:[%s1 + $0x28] sm:$0xf]
        %v236 = vld [vmem:[%s1 + $0x2c] sm:$0xf]
        %v237 = vld [vmem:[%s1 + $0x30] sm:$0xf]
        %v238 = vld [vmem:[%s1 + $0x34] sm:$0xf]
        %v239 = vld [vmem:[%s1 + $0x38] sm:$0xf]
        %v240 = vld [vmem:[%s1 + $0x3c] sm:$0xf]
        %v257 = vunpack.c.l.b16 %v209
        %v258 = vunpack.c.l.b16 %v210
        %v259 = vunpack.c.l.b16 %v211
        %v260 = vunpack.c.l.b16 %v212
        %v261 = vunpack.c.l.b16 %v213
        %v262 = vunpack.c.l.b16 %v214
        %v263 = vunpack.c.l.b16 %v215
        %v264 = vunpack.c.l.b16 %v216
        %v265 = vunpack.c.l.b16 %v217
        %v266 = vunpack.c.l.b16 %v218
        %v267 = vunpack.c.l.b16 %v219
        %v268 = vunpack.c.l.b16 %v220
        %v269 = vunpack.c.l.b16 %v221
        %v270 = vunpack.c.l.b16 %v222
        %v271 = vunpack.c.l.b16 %v223
        %v272 = vunpack.c.l.b16 %v224
        %v273 = vpack.c.b16 %v258, %v257
        %v274 = vpack.c.b16 %v260, %v259
        %v275 = vpack.c.b16 %v262, %v261
        %v276 = vpack.c.b16 %v264, %v263
        %v277 = vpack.c.b16 %v266, %v265
        %v278 = vpack.c.b16 %v268, %v267
        %v279 = vpack.c.b16 %v270, %v269
        %v280 = vpack.c.b16 %v272, %v271
        %v305 = vunpack.c.l.b16 %v225
        %v306 = vunpack.c.l.b16 %v226
        %v307 = vunpack.c.l.b16 %v227
        %v308 = vunpack.c.l.b16 %v228
        %v309 = vunpack.c.l.b16 %v229
        %v310 = vunpack.c.l.b16 %v230
        %v311 = vunpack.c.l.b16 %v231
        %v312 = vunpack.c.l.b16 %v232
        %v313 = vunpack.c.l.b16 %v233
        %v314 = vunpack.c.l.b16 %v234
        %v315 = vunpack.c.l.b16 %v235
        %v316 = vunpack.c.l.b16 %v236
        %v317 = vunpack.c.l.b16 %v237
        %v318 = vunpack.c.l.b16 %v238
        %v319 = vunpack.c.l.b16 %v239
        %v320 = vunpack.c.l.b16 %v240
        %v321 = vpack.c.b16 %v306, %v305
        %v322 = vpack.c.b16 %v308, %v307
        %v323 = vpack.c.b16 %v310, %v309
        %v324 = vpack.c.b16 %v312, %v311
        %v325 = vpack.c.b16 %v314, %v313
        %v326 = vpack.c.b16 %v316, %v315
        %v327 = vpack.c.b16 %v318, %v317
        %v328 = vpack.c.b16 %v320, %v319
        %337 = vmatprep.subr.bf16.mxu0 0
        %338 = vmatpush1.bf16.msra.mxu0 %v328
        %339 = vmatprep.subr.bf16.mxu0 0
        %340 = vmatpush1.bf16.msra.mxu0 %v327
        %341 = vmatprep.subr.bf16.mxu0 0
        %342 = vmatpush1.bf16.msra.mxu0 %v326
        %343 = vmatprep.subr.bf16.mxu0 0
        %344 = vmatpush1.bf16.msra.mxu0 %v325
        %345 = vmatprep.subr.bf16.mxu0 0
        %346 = vmatpush1.bf16.msra.mxu0 %v324
        %347 = vmatprep.subr.bf16.mxu0 0
        %348 = vmatpush1.bf16.msra.mxu0 %v323
        %349 = vmatprep.subr.bf16.mxu0 0
        %350 = vmatpush1.bf16.msra.mxu0 %v322
        %351 = vmatprep.subr.bf16.mxu0 0
        %352 = vmatpush1.bf16.msra.mxu0 %v321
        %353 = vmatprep.subr.bf16.mxu0 0
        %354 = vmatpush2.bf16.msra.mxu0 0
        %355 = vmatprep.subr.bf16.mxu0 0
        %356 = vmatpush2.bf16.msra.mxu0 0
        %357 = vmatprep.subr.bf16.mxu0 0
        %358 = vmatpush2.bf16.msra.mxu0 0
        %359 = vmatprep.subr.bf16.mxu0 0
        %360 = vmatpush2.bf16.msra.mxu0 0
        %361 = vmatprep.subr.bf16.mxu0 0
        %362 = vmatpush2.bf16.msra.mxu0 0
        %363 = vmatprep.subr.bf16.mxu0 0
        %364 = vmatpush2.bf16.msra.mxu0 0
        %365 = vmatprep.subr.bf16.mxu0 0
        %366 = vmatpush2.bf16.msra.mxu0 0
        %367 = vmatprep.subr.bf16.mxu0 0
        %368 = vmatpush2.bf16.msra.mxu0 0
        %369 = vmatprep.mubr.bf16.mxu0 0
        %370 = vmatmul.mubr.bf16.gmra.mxu0 %v273
        %v371 = vpop.f32.mrf.mxu0
        %v372 = vadd.f32 0.0, %v371
        %v373 = vpop.f32.mrf.mxu0
        %v374 = vpop.f32.mrf.mxu0
        %v375 = vadd.f32 0.0, %v374
        %v376 = vpop.f32.mrf.mxu0
        %377 = vmatprep.mubr.bf16.mxu0 0
        %378 = vmatmul.mubr.bf16.gmra.mxu0 %v274
        %v379 = vpop.f32.mrf.mxu0
        %v380 = vadd.f32 0.0, %v379
        %v381 = vpop.f32.mrf.mxu0
        %v382 = vpop.f32.mrf.mxu0
        %v383 = vadd.f32 0.0, %v382
        %v384 = vpop.f32.mrf.mxu0
        %385 = vmatprep.mubr.bf16.mxu0 0
        %386 = vmatmul.mubr.bf16.gmra.mxu0 %v275
        %v387 = vpop.f32.mrf.mxu0
        %v388 = vadd.f32 0.0, %v387
        %v389 = vpop.f32.mrf.mxu0
        %v390 = vpop.f32.mrf.mxu0
        %v391 = vadd.f32 0.0, %v390
        %v392 = vpop.f32.mrf.mxu0
        %393 = vmatprep.mubr.bf16.mxu0 0
        %394 = vmatmul.mubr.bf16.gmra.mxu0 %v276
        %v395 = vpop.f32.mrf.mxu0
        %v396 = vadd.f32 0.0, %v395
        %v397 = vpop.f32.mrf.mxu0
        %v398 = vpop.f32.mrf.mxu0
        %v399 = vadd.f32 0.0, %v398
        %v400 = vpop.f32.mrf.mxu0
        %401 = vmatprep.mubr.bf16.mxu0 0
        %402 = vmatmul.mubr.bf16.gmra.mxu0 %v277
        %v403 = vpop.f32.mrf.mxu0
        %v404 = vadd.f32 0.0, %v403
        %v405 = vpop.f32.mrf.mxu0
        %v406 = vpop.f32.mrf.mxu0
        %v407 = vadd.f32 0.0, %v406
        %v408 = vpop.f32.mrf.mxu0
        %409 = vmatprep.mubr.bf16.mxu0 0
        %410 = vmatmul.mubr.bf16.gmra.mxu0 %v278
        %v411 = vpop.f32.mrf.mxu0
        %v412 = vadd.f32 0.0, %v411
        %v413 = vpop.f32.mrf.mxu0
        %v414 = vpop.f32.mrf.mxu0
        %v415 = vadd.f32 0.0, %v414
        %v416 = vpop.f32.mrf.mxu0
        %417 = vmatprep.mubr.bf16.mxu0 0
        %418 = vmatmul.mubr.bf16.gmra.mxu0 %v279
        %v419 = vpop.f32.mrf.mxu0
        %v420 = vadd.f32 0.0, %v419
        %v421 = vpop.f32.mrf.mxu0
        %v422 = vpop.f32.mrf.mxu0
        %v423 = vadd.f32 0.0, %v422
        %v424 = vpop.f32.mrf.mxu0
        %425 = vmatprep.mubr.bf16.mxu0 0
        %426 = vmatmul.mubr.bf16.gmra.mxu0 %v280
        %v427 = vpop.f32.mrf.mxu0
        %v428 = vadd.f32 0.0, %v427
        %v429 = vpop.f32.mrf.mxu0
        %v430 = vpop.f32.mrf.mxu0
        %v431 = vadd.f32 0.0, %v430
        %v432 = vpop.f32.mrf.mxu0
        %433 = vdwg.mxu0
        %v434 = vpack.c.bf16 %v375, %v372
        %v435 = vpack.c.bf16 %v383, %v380
        %v436 = vpack.c.bf16 %v391, %v388
        %v437 = vpack.c.bf16 %v399, %v396
        %v438 = vpack.c.bf16 %v407, %v404
        %v439 = vpack.c.bf16 %v415, %v412
        %v440 = vpack.c.bf16 %v423, %v420
        %v441 = vpack.c.bf16 %v431, %v428
        %v442 = vld [vmem:[#allocation4] sm:$0xff]
        %v443 = vld [vmem:[#allocation4 + $0x8] sm:$0xff]
        %v444 = vld [vmem:[#allocation4 + $0x10] sm:$0xff]
        %v445 = vld [vmem:[#allocation4 + $0x18] sm:$0xff]
        %v446 = vld [vmem:[#allocation4 + $0x20] sm:$0xff]
        %v447 = vld [vmem:[#allocation4 + $0x28] sm:$0xff]
        %v448 = vld [vmem:[#allocation4 + $0x30] sm:$0xff]
        %v449 = vld [vmem:[#allocation4 + $0x38] sm:$0xff]
        %v450 = vld [vmem:[#allocation4 + $0x40] sm:$0xff]
        %v451 = vld [vmem:[#allocation4 + $0x48] sm:$0xff]
        %v452 = vld [vmem:[#allocation4 + $0x50] sm:$0xff]
        %v453 = vld [vmem:[#allocation4 + $0x58] sm:$0xff]
        %v454 = vld [vmem:[#allocation4 + $0x60] sm:$0xff]
        %v455 = vld [vmem:[#allocation4 + $0x68] sm:$0xff]
        %v456 = vld [vmem:[#allocation4 + $0x70] sm:$0xff]
        %v457 = vld [vmem:[#allocation4 + $0x78] sm:$0xff]
        %466 = vrot.lane.b32.xlu0 %v434, 96
        %v467 = vpop.permute.xlu0 %466
        %468 = vrot.lane.b32.xlu0 %v435, 96
        %v469 = vpop.permute.xlu0 %468
        %470 = vrot.lane.b32.xlu0 %v436, 96
        %v471 = vpop.permute.xlu0 %470
        %472 = vrot.lane.b32.xlu0 %v437, 96
        %v473 = vpop.permute.xlu0 %472
        %474 = vrot.lane.b32.xlu0 %v438, 96
        %v475 = vpop.permute.xlu0 %474
        %476 = vrot.lane.b32.xlu0 %v439, 96
        %v477 = vpop.permute.xlu0 %476
        %478 = vrot.lane.b32.xlu0 %v440, 96
        %v479 = vpop.permute.xlu0 %478
        %480 = vrot.lane.b32.xlu0 %v441, 96
        %v481 = vpop.permute.xlu0 %480
        %vm482 = vcmask 261120
        %v484 = vsel %vm482, %v434, 0
        %v487 = vsel %vm482, %v435, 0
        %v490 = vsel %vm482, %v436, 0
        %v493 = vsel %vm482, %v437, 0
        %v496 = vsel %vm482, %v438, 0
        %v499 = vsel %vm482, %v439, 0
        %v502 = vsel %vm482, %v440, 0
        %v505 = vsel %vm482, %v441, 0
        %v508 = vsel %vm482, %v467, 0
        %v511 = vsel %vm482, %v469, 0
        %v514 = vsel %vm482, %v471, 0
        %v517 = vsel %vm482, %v473, 0
        %v520 = vsel %vm482, %v475, 0
        %v523 = vsel %vm482, %v477, 0
        %v526 = vsel %vm482, %v479, 0
        %v529 = vsel %vm482, %v481, 0
        %531 = vmatprep.subr.bf16.mxu0 0
        %532 = vmatpush1.bf16.xpose.msra.mxu0 %v529
        %533 = vmatprep.subr.bf16.mxu0 0
        %534 = vmatpush1.bf16.xpose.msra.mxu0 %v526
        %535 = vmatprep.subr.bf16.mxu0 0
        %536 = vmatpush1.bf16.xpose.msra.mxu0 %v523
        %537 = vmatprep.subr.bf16.mxu0 0
        %538 = vmatpush1.bf16.xpose.msra.mxu0 %v520
        %539 = vmatprep.subr.bf16.mxu0 0
        %540 = vmatpush1.bf16.xpose.msra.mxu0 %v517
        %541 = vmatprep.subr.bf16.mxu0 0
        %542 = vmatpush1.bf16.xpose.msra.mxu0 %v514
        %543 = vmatprep.subr.bf16.mxu0 0
        %544 = vmatpush1.bf16.xpose.msra.mxu0 %v511
        %545 = vmatprep.subr.bf16.mxu0 0
        %546 = vmatpush1.bf16.xpose.msra.mxu0 %v508
        %547 = vmatprep.subr.bf16.mxu0 0
        %548 = vmatpush2.bf16.xpose.msra.mxu0 0
        %549 = vmatprep.subr.bf16.mxu0 0
        %550 = vmatpush2.bf16.xpose.msra.mxu0 0
        %551 = vmatprep.subr.bf16.mxu0 0
        %552 = vmatpush2.bf16.xpose.msra.mxu0 0
        %553 = vmatprep.subr.bf16.mxu0 0
        %554 = vmatpush2.bf16.xpose.msra.mxu0 0
        %555 = vmatprep.subr.bf16.mxu0 0
        %556 = vmatpush2.bf16.xpose.msra.mxu0 0
        %557 = vmatprep.subr.bf16.mxu0 0
        %558 = vmatpush2.bf16.xpose.msra.mxu0 0
        %559 = vmatprep.subr.bf16.mxu0 0
        %560 = vmatpush2.bf16.xpose.msra.mxu0 0
        %561 = vmatprep.subr.bf16.mxu0 0
        %562 = vmatpush2.bf16.xpose.msra.mxu0 0
        %563 = vmatprep.mubr.bf16.mxu0 0
        %564 = vmatmul.mubr.bf16.gmra.mxu0 %v484
        %v565 = vpop.f32.mrf.mxu0
        %v566 = vadd.f32 %v442, %v565
        %v567 = vpop.f32.mrf.mxu0
        %v568 = vpop.f32.mrf.mxu0
        %v569 = vadd.f32 %v443, %v568
        %v570 = vpop.f32.mrf.mxu0
        %571 = vmatprep.mubr.bf16.mxu0 0
        %572 = vmatmul.mubr.bf16.gmra.mxu0 %v487
        %v573 = vpop.f32.mrf.mxu0
        %v574 = vadd.f32 %v444, %v573
        %v575 = vpop.f32.mrf.mxu0
        %v576 = vpop.f32.mrf.mxu0
        %v577 = vadd.f32 %v445, %v576
        %v578 = vpop.f32.mrf.mxu0
        %579 = vmatprep.mubr.bf16.mxu0 0
        %580 = vmatmul.mubr.bf16.gmra.mxu0 %v490
        %v581 = vpop.f32.mrf.mxu0
        %v582 = vadd.f32 %v446, %v581
        %v583 = vpop.f32.mrf.mxu0
        %v584 = vpop.f32.mrf.mxu0
        %v585 = vadd.f32 %v447, %v584
        %v586 = vpop.f32.mrf.mxu0
        %587 = vmatprep.mubr.bf16.mxu0 0
        %588 = vmatmul.mubr.bf16.gmra.mxu0 %v493
        %v589 = vpop.f32.mrf.mxu0
        %v590 = vadd.f32 %v448, %v589
        %v591 = vpop.f32.mrf.mxu0
        %v592 = vpop.f32.mrf.mxu0
        %v593 = vadd.f32 %v449, %v592
        %v594 = vpop.f32.mrf.mxu0
        %595 = vmatprep.mubr.bf16.mxu0 0
        %596 = vmatmul.mubr.bf16.gmra.mxu0 %v496
        %v597 = vpop.f32.mrf.mxu0
        %v598 = vadd.f32 %v450, %v597
        %v599 = vpop.f32.mrf.mxu0
        %v600 = vpop.f32.mrf.mxu0
        %v601 = vadd.f32 %v451, %v600
        %v602 = vpop.f32.mrf.mxu0
        %603 = vmatprep.mubr.bf16.mxu0 0
        %604 = vmatmul.mubr.bf16.gmra.mxu0 %v499
        %v605 = vpop.f32.mrf.mxu0
        %v606 = vadd.f32 %v452, %v605
        %v607 = vpop.f32.mrf.mxu0
        %v608 = vpop.f32.mrf.mxu0
        %v609 = vadd.f32 %v453, %v608
        %v610 = vpop.f32.mrf.mxu0
        %611 = vmatprep.mubr.bf16.mxu0 0
        %612 = vmatmul.mubr.bf16.gmra.mxu0 %v502
        %v613 = vpop.f32.mrf.mxu0
        %v614 = vadd.f32 %v454, %v613
        %v615 = vpop.f32.mrf.mxu0
        %v616 = vpop.f32.mrf.mxu0
        %v617 = vadd.f32 %v455, %v616
        %v618 = vpop.f32.mrf.mxu0
        %619 = vmatprep.mubr.bf16.mxu0 0
        %620 = vmatmul.mubr.bf16.gmra.mxu0 %v505
        %v621 = vpop.f32.mrf.mxu0
        %v622 = vadd.f32 %v456, %v621
        %v623 = vpop.f32.mrf.mxu0
        %v624 = vpop.f32.mrf.mxu0
        %v625 = vadd.f32 %v457, %v624
        %v626 = vpop.f32.mrf.mxu0
        %627 = vdwg.mxu0
        %628 = vmax.xlane.f32.xlu0 %v566
        %v629 = vpop.xlane.xlu0 %628
        %630 = vmax.xlane.f32.xlu0 %v569
        %v631 = vpop.xlane.xlu0 %630
        %632 = vmax.xlane.f32.xlu0 %v574
        %v633 = vpop.xlane.xlu0 %632
        %634 = vmax.xlane.f32.xlu0 %v577
        %v635 = vpop.xlane.xlu0 %634
        %636 = vmax.xlane.f32.xlu0 %v582
        %v637 = vpop.xlane.xlu0 %636
        %638 = vmax.xlane.f32.xlu0 %v585
        %v639 = vpop.xlane.xlu0 %638
        %640 = vmax.xlane.f32.xlu0 %v590
        %v641 = vpop.xlane.xlu0 %640
        %642 = vmax.xlane.f32.xlu0 %v593
        %v643 = vpop.xlane.xlu0 %642
        %644 = vmax.xlane.f32.xlu0 %v598
        %v645 = vpop.xlane.xlu0 %644
        %646 = vmax.xlane.f32.xlu0 %v601
        %v647 = vpop.xlane.xlu0 %646
        %648 = vmax.xlane.f32.xlu0 %v606
        %v649 = vpop.xlane.xlu0 %648
        %650 = vmax.xlane.f32.xlu0 %v609
        %v651 = vpop.xlane.xlu0 %650
        %652 = vmax.xlane.f32.xlu0 %v614
        %v653 = vpop.xlane.xlu0 %652
        %654 = vmax.xlane.f32.xlu0 %v617
        %v655 = vpop.xlane.xlu0 %654
        %656 = vmax.xlane.f32.xlu0 %v622
        %v657 = vpop.xlane.xlu0 %656
        %658 = vmax.xlane.f32.xlu0 %v625
        %v659 = vpop.xlane.xlu0 %658
        %v660 = vsub.f32 %v566, %v629
        %v661 = vsub.f32 %v569, %v631
        %v662 = vsub.f32 %v574, %v633
        %v663 = vsub.f32 %v577, %v635
        %v664 = vsub.f32 %v582, %v637
        %v665 = vsub.f32 %v585, %v639
        %v666 = vsub.f32 %v590, %v641
        %v667 = vsub.f32 %v593, %v643
        %v668 = vsub.f32 %v598, %v645
        %v669 = vsub.f32 %v601, %v647
        %v670 = vsub.f32 %v606, %v649
        %v671 = vsub.f32 %v609, %v651
        %v672 = vsub.f32 %v614, %v653
        %v673 = vsub.f32 %v617, %v655
        %v674 = vsub.f32 %v622, %v657
        %v675 = vsub.f32 %v625, %v659
        %v676 = vmul.f32 %v660, 1.442695
        %v677 = vpow.pop %v676
        %v678 = vmul.f32 %v661, 1.442695
        %v679 = vpow.pop %v678
        %v680 = vmul.f32 %v662, 1.442695
        %v681 = vpow.pop %v680
        %v682 = vmul.f32 %v663, 1.442695
        %v683 = vpow.pop %v682
        %v684 = vmul.f32 %v664, 1.442695
        %v685 = vpow.pop %v684
        %v686 = vmul.f32 %v665, 1.442695
        %v687 = vpow.pop %v686
        %v688 = vmul.f32 %v666, 1.442695
        %v689 = vpow.pop %v688
        %v690 = vmul.f32 %v667, 1.442695
        %v691 = vpow.pop %v690
        %v692 = vmul.f32 %v668, 1.442695
        %v693 = vpow.pop %v692
        %v694 = vmul.f32 %v669, 1.442695
        %v695 = vpow.pop %v694
        %v696 = vmul.f32 %v670, 1.442695
        %v697 = vpow.pop %v696
        %v698 = vmul.f32 %v671, 1.442695
        %v699 = vpow.pop %v698
        %v700 = vmul.f32 %v672, 1.442695
        %v701 = vpow.pop %v700
        %v702 = vmul.f32 %v673, 1.442695
        %v703 = vpow.pop %v702
        %v704 = vmul.f32 %v674, 1.442695
        %v705 = vpow.pop %v704
        %v706 = vmul.f32 %v675, 1.442695
        %v707 = vpow.pop %v706
        %708 = vadd.xlane.f32.xlu0 %v677
        %v709 = vpop.xlane.xlu0 %708
        %710 = vadd.xlane.f32.xlu0 %v679
        %v711 = vpop.xlane.xlu0 %710
        %712 = vadd.xlane.f32.xlu0 %v681
        %v713 = vpop.xlane.xlu0 %712
        %714 = vadd.xlane.f32.xlu0 %v683
        %v715 = vpop.xlane.xlu0 %714
        %716 = vadd.xlane.f32.xlu0 %v685
        %v717 = vpop.xlane.xlu0 %716
        %718 = vadd.xlane.f32.xlu0 %v687
        %v719 = vpop.xlane.xlu0 %718
        %720 = vadd.xlane.f32.xlu0 %v689
        %v721 = vpop.xlane.xlu0 %720
        %722 = vadd.xlane.f32.xlu0 %v691
        %v723 = vpop.xlane.xlu0 %722
        %724 = vadd.xlane.f32.xlu0 %v693
        %v725 = vpop.xlane.xlu0 %724
        %726 = vadd.xlane.f32.xlu0 %v695
        %v727 = vpop.xlane.xlu0 %726
        %728 = vadd.xlane.f32.xlu0 %v697
        %v729 = vpop.xlane.xlu0 %728
        %730 = vadd.xlane.f32.xlu0 %v699
        %v731 = vpop.xlane.xlu0 %730
        %732 = vadd.xlane.f32.xlu0 %v701
        %v733 = vpop.xlane.xlu0 %732
        %734 = vadd.xlane.f32.xlu0 %v703
        %v735 = vpop.xlane.xlu0 %734
        %736 = vadd.xlane.f32.xlu0 %v705
        %v737 = vpop.xlane.xlu0 %736
        %738 = vadd.xlane.f32.xlu0 %v707
        %v739 = vpop.xlane.xlu0 %738
        %v740 = vrcp.pop %v709
        %v741 = vrcp.pop %v711
        %v742 = vrcp.pop %v713
        %v743 = vrcp.pop %v715
        %v744 = vrcp.pop %v717
        %v745 = vrcp.pop %v719
        %v746 = vrcp.pop %v721
        %v747 = vrcp.pop %v723
        %v748 = vrcp.pop %v725
        %v749 = vrcp.pop %v727
        %v750 = vrcp.pop %v729
        %v751 = vrcp.pop %v731
        %v752 = vrcp.pop %v733
        %v753 = vrcp.pop %v735
        %v754 = vrcp.pop %v737
        %v755 = vrcp.pop %v739
        %v756 = vmul.f32 %v677, %v740
        %v757 = vmul.f32 %v679, %v741
        %v758 = vmul.f32 %v681, %v742
        %v759 = vmul.f32 %v683, %v743
        %v760 = vmul.f32 %v685, %v744
        %v761 = vmul.f32 %v687, %v745
        %v762 = vmul.f32 %v689, %v746
        %v763 = vmul.f32 %v691, %v747
        %v764 = vmul.f32 %v693, %v748
        %v765 = vmul.f32 %v695, %v749
        %v766 = vmul.f32 %v697, %v750
        %v767 = vmul.f32 %v699, %v751
        %v768 = vmul.f32 %v701, %v752
        %v769 = vmul.f32 %v703, %v753
        %v770 = vmul.f32 %v705, %v754
        %v771 = vmul.f32 %v707, %v755
        %v772 = vpack.c.bf16 %v757, %v756
        %v773 = vpack.c.bf16 %v759, %v758
        %v774 = vpack.c.bf16 %v761, %v760
        %v775 = vpack.c.bf16 %v763, %v762
        %v776 = vpack.c.bf16 %v765, %v764
        %v777 = vpack.c.bf16 %v767, %v766
        %v778 = vpack.c.bf16 %v769, %v768
        %v779 = vpack.c.bf16 %v771, %v770
        %780 = vrot.lane.b32.xlu0 %v434, 64
        %v781 = vpop.permute.xlu0 %780
        %782 = vrot.lane.b32.xlu0 %v435, 64
        %v783 = vpop.permute.xlu0 %782
        %784 = vrot.lane.b32.xlu0 %v436, 64
        %v785 = vpop.permute.xlu0 %784
        %786 = vrot.lane.b32.xlu0 %v437, 64
        %v787 = vpop.permute.xlu0 %786
        %788 = vrot.lane.b32.xlu0 %v438, 64
        %v789 = vpop.permute.xlu0 %788
        %790 = vrot.lane.b32.xlu0 %v439, 64
        %v791 = vpop.permute.xlu0 %790
        %792 = vrot.lane.b32.xlu0 %v440, 64
        %v793 = vpop.permute.xlu0 %792
        %794 = vrot.lane.b32.xlu0 %v441, 64
        %v795 = vpop.permute.xlu0 %794
        %804 = vmatprep.subr.bf16.mxu0 0
        %805 = vmatpush1.bf16.msra.mxu0 %v795
        %806 = vmatprep.subr.bf16.mxu0 0
        %807 = vmatpush1.bf16.msra.mxu0 %v793
        %808 = vmatprep.subr.bf16.mxu0 0
        %809 = vmatpush1.bf16.msra.mxu0 %v791
        %810 = vmatprep.subr.bf16.mxu0 0
        %811 = vmatpush1.bf16.msra.mxu0 %v789
        %812 = vmatprep.subr.bf16.mxu0 0
        %813 = vmatpush1.bf16.msra.mxu0 %v787
        %814 = vmatprep.subr.bf16.mxu0 0
        %815 = vmatpush1.bf16.msra.mxu0 %v785
        %816 = vmatprep.subr.bf16.mxu0 0
        %817 = vmatpush1.bf16.msra.mxu0 %v783
        %818 = vmatprep.subr.bf16.mxu0 0
        %819 = vmatpush1.bf16.msra.mxu0 %v781
        %820 = vmatprep.subr.bf16.mxu0 0
        %821 = vmatpush2.bf16.msra.mxu0 0
        %822 = vmatprep.subr.bf16.mxu0 0
        %823 = vmatpush2.bf16.msra.mxu0 0
        %824 = vmatprep.subr.bf16.mxu0 0
        %825 = vmatpush2.bf16.msra.mxu0 0
        %826 = vmatprep.subr.bf16.mxu0 0
        %827 = vmatpush2.bf16.msra.mxu0 0
        %828 = vmatprep.subr.bf16.mxu0 0
        %829 = vmatpush2.bf16.msra.mxu0 0
        %830 = vmatprep.subr.bf16.mxu0 0
        %831 = vmatpush2.bf16.msra.mxu0 0
        %832 = vmatprep.subr.bf16.mxu0 0
        %833 = vmatpush2.bf16.msra.mxu0 0
        %834 = vmatprep.subr.bf16.mxu0 0
        %835 = vmatpush2.bf16.msra.mxu0 0
        %836 = vmatprep.mubr.bf16.mxu0 0
        %837 = vmatmul.mubr.bf16.gmra.mxu0 %v772
        %v838 = vpop.f32.mrf.mxu0
        %v839 = vadd.f32 0.0, %v838
        %v840 = vpop.f32.mrf.mxu0
        %v841 = vpop.f32.mrf.mxu0
        %v842 = vadd.f32 0.0, %v841
        %v843 = vpop.f32.mrf.mxu0
        %844 = vmatprep.mubr.bf16.mxu0 0
        %845 = vmatmul.mubr.bf16.gmra.mxu0 %v773
        %v846 = vpop.f32.mrf.mxu0
        %v847 = vadd.f32 0.0, %v846
        %v848 = vpop.f32.mrf.mxu0
        %v849 = vpop.f32.mrf.mxu0
        %v850 = vadd.f32 0.0, %v849
        %v851 = vpop.f32.mrf.mxu0
        %852 = vmatprep.mubr.bf16.mxu0 0
        %853 = vmatmul.mubr.bf16.gmra.mxu0 %v774
        %v854 = vpop.f32.mrf.mxu0
        %v855 = vadd.f32 0.0, %v854
        %v856 = vpop.f32.mrf.mxu0
        %v857 = vpop.f32.mrf.mxu0
        %v858 = vadd.f32 0.0, %v857
        %v859 = vpop.f32.mrf.mxu0
        %860 = vmatprep.mubr.bf16.mxu0 0
        %861 = vmatmul.mubr.bf16.gmra.mxu0 %v775
        %v862 = vpop.f32.mrf.mxu0
        %v863 = vadd.f32 0.0, %v862
        %v864 = vpop.f32.mrf.mxu0
        %v865 = vpop.f32.mrf.mxu0
        %v866 = vadd.f32 0.0, %v865
        %v867 = vpop.f32.mrf.mxu0
        %868 = vmatprep.mubr.bf16.mxu0 0
        %869 = vmatmul.mubr.bf16.gmra.mxu0 %v776
        %v870 = vpop.f32.mrf.mxu0
        %v871 = vadd.f32 0.0, %v870
        %v872 = vpop.f32.mrf.mxu0
        %v873 = vpop.f32.mrf.mxu0
        %v874 = vadd.f32 0.0, %v873
        %v875 = vpop.f32.mrf.mxu0
        %876 = vmatprep.mubr.bf16.mxu0 0
        %877 = vmatmul.mubr.bf16.gmra.mxu0 %v777
        %v878 = vpop.f32.mrf.mxu0
        %v879 = vadd.f32 0.0, %v878
        %v880 = vpop.f32.mrf.mxu0
        %v881 = vpop.f32.mrf.mxu0
        %v882 = vadd.f32 0.0, %v881
        %v883 = vpop.f32.mrf.mxu0
        %884 = vmatprep.mubr.bf16.mxu0 0
        %885 = vmatmul.mubr.bf16.gmra.mxu0 %v778
        %v886 = vpop.f32.mrf.mxu0
        %v887 = vadd.f32 0.0, %v886
        %v888 = vpop.f32.mrf.mxu0
        %v889 = vpop.f32.mrf.mxu0
        %v890 = vadd.f32 0.0, %v889
        %v891 = vpop.f32.mrf.mxu0
        %892 = vmatprep.mubr.bf16.mxu0 0
        %893 = vmatmul.mubr.bf16.gmra.mxu0 %v779
        %v894 = vpop.f32.mrf.mxu0
        %v895 = vadd.f32 0.0, %v894
        %v896 = vpop.f32.mrf.mxu0
        %v897 = vpop.f32.mrf.mxu0
        %v898 = vadd.f32 0.0, %v897
        %v899 = vpop.f32.mrf.mxu0
        %900 = vdwg.mxu0
        %901 = vst.msk [vmem:[%s206] sm:$0xff] %vm482, %v839
        %902 = vst.msk [vmem:[%s206 + $0x8] sm:$0xff] %vm482, %v842
        %903 = vst.msk [vmem:[%s206 + $0x10] sm:$0xff] %vm482, %v847
        %904 = vst.msk [vmem:[%s206 + $0x18] sm:$0xff] %vm482, %v850
        %905 = vst.msk [vmem:[%s206 + $0x20] sm:$0xff] %vm482, %v855
        %906 = vst.msk [vmem:[%s206 + $0x28] sm:$0xff] %vm482, %v858
        %907 = vst.msk [vmem:[%s206 + $0x30] sm:$0xff] %vm482, %v863
        %908 = vst.msk [vmem:[%s206 + $0x38] sm:$0xff] %vm482, %v866
        %909 = vst.msk [vmem:[%s206 + $0x40] sm:$0xff] %vm482, %v871
        %910 = vst.msk [vmem:[%s206 + $0x48] sm:$0xff] %vm482, %v874
        %911 = vst.msk [vmem:[%s206 + $0x50] sm:$0xff] %vm482, %v879
        %912 = vst.msk [vmem:[%s206 + $0x58] sm:$0xff] %vm482, %v882
        %913 = vst.msk [vmem:[%s206 + $0x60] sm:$0xff] %vm482, %v887
        %914 = vst.msk [vmem:[%s206 + $0x68] sm:$0xff] %vm482, %v890
        %915 = vst.msk [vmem:[%s206 + $0x70] sm:$0xff] %vm482, %v895
        %916 = vst.msk [vmem:[%s206 + $0x78] sm:$0xff] %vm482, %v898
        %s917 = smul.u32 16, %s18
        %p918 = scmp.lt.s32.totalorder %s917, 31
        %s919 = scalar_select %p918, %s917, 31
        %s920 = smul.addr %s919, 8
        %s921 = scalar_lea.vmem %s3, %s920
        // Predicated region
        $region41: #{tpu_custom_call.1} parent=31 // pred_check
          %p922 = pneg %p104
        $region42: #{tpu_custom_call.1} parent=31 // pred_check_branch
          %924 = sbr.rel (%p922) target = $region44
        $region43: #{tpu_custom_call.1} parent=31 // pred_region
          %s925 = smul.u32 16, %s18
        $region44: #{tpu_custom_call.1} parent=31 // pred_fallthru
          _
      $region32: #{tpu_custom_call.1} parent=5 // pred_fallthru
        _
      %p926 = scmp.le.s32.totalorder 2, %s13
      // Predicated region
      $region45: #{tpu_custom_call.1} parent=5 // pred_check
        %p927 = pneg %p926
      $region46: #{tpu_custom_call.1} parent=5 // pred_check_branch
        %929 = sbr.rel (%p927) target = $region48
      $region47: #{tpu_custom_call.1} parent=5 // pred_region
        %s930 = ssub.s32 %s13, 2
        // Predicated region
        $region49: #{tpu_custom_call.1} parent=47 // pred_check
          %p931 = pneg %p110
        $region50: #{tpu_custom_call.1} parent=47 // pred_check_branch
          %933 = sbr.rel (%p931) target = $region52
        $region51: #{tpu_custom_call.1} parent=47 // pred_region
          %s934 = smul.u32 16, %s19
          %p935 = scmp.lt.s32.totalorder %s934, 31
          %s936 = scalar_select %p935, %s934, 31
          %s937 = smul.addr %s936, 8
          %s938 = scalar_lea.vmem %s3, %s937
        $region52: #{tpu_custom_call.1} parent=47 // pred_fallthru
          _
      $region48: #{tpu_custom_call.1} parent=5 // pred_fallthru
        _
    $region6: #{tpu_custom_call.1} parent=1 // loop_footer
      %s17 = sadd.s32 1, %s13
    $region7: #{tpu_custom_call.1} parent=1 // loop_footer_branch
      %12 = sbr.rel target = $region3
    $region8: #{tpu_custom_call.1} parent=1 // loop_exit
      _
    %939 = vsyncpa [#allocation3], 1
    %s940 = scalar_lea.sflag [#allocation3], 1
    %941 = vsyncpa %s940, 1
    %942 = vsyncpa [#allocation5], 1

</llo_original>
